<compile_context>
chip_gen: v5e
topology: v5e:2x2
jax: 0.10.0
libtpu: 0.0.40
codegen_flags: <defaults>
</compile_context>

<pallas_src>
import functools

import jax
import jax.numpy as jnp
from jax.experimental import pallas as pl
from jax.experimental.pallas import tpu as pltpu

HIDDEN = 64
LANES = 128
SUBLANES = 8


def _round_up(n, m):
    return ((n + m - 1) // m) * m


def _slab_layout(input_size, hidden):
    """Row offsets of each parameter segment inside the packed (rows, 128) slab.

    Every segment starts on an 8-row (sublane) boundary so in-kernel slices are
    aligned."""
    r_in = _round_up(input_size, SUBLANES)
    r_h = _round_up(hidden, SUBLANES)
    o_w1 = 0
    o_b1 = o_w1 + r_in
    o_w2 = o_b1 + SUBLANES
    o_b2 = o_w2 + r_h
    o_w3 = o_b2 + SUBLANES
    o_b3 = o_w3 + r_h
    rows = o_b3 + SUBLANES
    return o_w1, o_b1, o_w2, o_b2, o_w3, o_b3, rows


def pack_params(params, input_size, output_size, hidden=HIDDEN):
    """Pack w1,b1,w2,b2,w3,b3 into a single lane-padded (rows, 128) f32 slab.

    Weights are stored (in, out) == W_pt.T so the kernel computes y = x @ W + b,
    numerically identical to PyTorch's Linear.  Do this ONCE per parameter set
    (e.g. once per neuroevolution candidate) and reuse the slab across calls.
    """
    o_w1, o_b1, o_w2, o_b2, o_w3, o_b3, rows = _slab_layout(input_size, hidden)
    slab = jnp.zeros((rows, LANES), jnp.float32)
    slab = slab.at[o_w1:o_w1 + input_size, :hidden].set(params["w1"])
    slab = slab.at[o_b1, :hidden].set(params["b1"].reshape(-1))
    slab = slab.at[o_w2:o_w2 + hidden, :hidden].set(params["w2"])
    slab = slab.at[o_b2, :hidden].set(params["b2"].reshape(-1))
    slab = slab.at[o_w3:o_w3 + hidden, :output_size].set(params["w3"])
    slab = slab.at[o_b3, :output_size].set(params["b3"].reshape(-1))
    return slab


def _make_kernel(input_size, output_size, hidden):
    o_w1, o_b1, o_w2, o_b2, o_w3, o_b3, _ = _slab_layout(input_size, hidden)

    def kernel(x_ref, p_ref, o_ref):
        x = x_ref[...]                                              # (TB, in)
        # Static slices into the resident parameter slab (no extra DMAs).
        w1 = p_ref[o_w1:o_w1 + input_size, 0:hidden]                # (in, 64)
        b1 = p_ref[o_b1:o_b1 + 1, 0:hidden]                         # (1, 64)
        w2 = p_ref[o_w2:o_w2 + hidden, 0:hidden]                    # (64, 64)
        b2 = p_ref[o_b2:o_b2 + 1, 0:hidden]
        w3 = p_ref[o_w3:o_w3 + hidden, 0:output_size]               # (64, out)
        b3 = p_ref[o_b3:o_b3 + 1, 0:output_size]

        # Three MXU matmuls with f32 accumulation + VPU bias/ReLU.
        h1 = jnp.maximum(jnp.dot(x, w1, preferred_element_type=jnp.float32) + b1, 0.0)
        h2 = jnp.maximum(jnp.dot(h1, w2, preferred_element_type=jnp.float32) + b2, 0.0)
        logits = jnp.dot(h2, w3, preferred_element_type=jnp.float32) + b3

        # Numerically-stable softmax; division replaced by EUP approx
        # reciprocal (one per row) + one Newton step for ~f32 accuracy.
        m = jnp.max(logits, axis=-1, keepdims=True)
        e = jnp.exp(logits - m)
        s = jnp.sum(e, axis=-1, keepdims=True)
        inv = pl.reciprocal(s, approx=True)
        inv = inv * (2.0 - s * inv)
        o_ref[...] = e * inv

    return kernel


@functools.lru_cache(maxsize=None)
def _build_forward(batch, input_size, output_size, hidden, block_b):
    *_, rows = _slab_layout(input_size, hidden)

    # Batch tile: full batch if it fits a single tile, else a multiple of 8.
    tb = batch if batch <= block_b else block_b
    grid = (pl.cdiv(batch, tb),)

    flops = 2 * batch * (input_size * hidden + hidden * hidden + hidden * output_size)
    bytes_accessed = 4 * (batch * input_size + rows * LANES + batch * output_size)
    cost = pl.CostEstimate(flops=flops,
                           transcendentals=batch * output_size,
                           bytes_accessed=bytes_accessed)

    return pl.pallas_call(
        _make_kernel(input_size, output_size, hidden),
        out_shape=jax.ShapeDtypeStruct((batch, output_size), jnp.float32),
        grid=grid,
        in_specs=[
            pl.BlockSpec((tb, input_size), lambda i: (i, 0)),   # batch-tiled activations
            pl.BlockSpec((rows, LANES), lambda i: (0, 0)),      # grid-invariant param slab
        ],
        out_specs=pl.BlockSpec((tb, output_size), lambda i: (i, 0)),
        compiler_params=pltpu.CompilerParams(
            dimension_semantics=("parallel",),   # v7x: shard batch tiles over 2 TCs
        ),
        cost_estimate=cost,
    )


def neural_network_forward(x, packed, output_size, hidden=HIDDEN, block_b=4096):
    """x: (B, input_size) f32. packed: slab from pack_params (reused across calls)."""
    batch, input_size = x.shape
    fwd = _build_forward(batch, input_size, output_size, hidden, block_b)
    return fwd(x, packed)


def init_params(key, input_size, output_size, hidden=HIDDEN):
    """Deterministic init mimicking PyTorch Linear default (U(-1/sqrt(fan_in), ..))."""
    ks = jax.random.split(key, 6)

    def lin(kw, kb, fan_in, fan_out):
        bound = 1.0 / jnp.sqrt(jnp.float32(fan_in))
        w = jax.random.uniform(kw, (fan_in, fan_out), jnp.float32, -bound, bound)  # W_pt.T
        b = jax.random.uniform(kb, (1, fan_out), jnp.float32, -bound, bound)
        return w, b

    w1, b1 = lin(ks[0], ks[1], input_size, hidden)
    w2, b2 = lin(ks[2], ks[3], hidden, hidden)
    w3, b3 = lin(ks[4], ks[5], hidden, output_size)
    return {"w1": w1, "b1": b1, "w2": w2, "b2": b2, "w3": w3, "b3": b3}


def _reference(x, p):
    h1 = jnp.maximum(x @ p["w1"] + p["b1"], 0.0)
    h2 = jnp.maximum(h1 @ p["w2"] + p["b2"], 0.0)
    return jax.nn.softmax(h2 @ p["w3"] + p["b3"], axis=-1)


if __name__ == "__main__":
    key = jax.random.PRNGKey(0)
    k_x, k_p, k_big = jax.random.split(key, 3)

    batch, input_size, output_size = 8, 8, 4  # small RL-style obs/action dims
    x = jax.random.normal(k_x, (batch, input_size), jnp.float32)
    params = init_params(k_p, input_size, output_size)
    packed = pack_params(params, input_size, output_size)  # pack once, reuse every step

    out = neural_network_forward(x, packed, output_size)
    out = jax.block_until_ready(out)

    ref = _reference(x, params)
    assert out.shape == (batch, output_size)
    # tolerances account for the approx-reciprocal (+ Newton step) softmax denom
    assert jnp.allclose(out, ref, atol=5e-4, rtol=5e-4)
    assert jnp.allclose(jnp.sum(out, axis=-1), 1.0, atol=5e-4)

    # Exercise the batch grid (multiple tiles, "parallel" semantics) as well.
    xb = jax.random.normal(k_big, (1024, input_size), jnp.float32)
    outb = jax.block_until_ready(
        neural_network_forward(xb, packed, output_size, block_b=256))
    refb = _reference(xb, params)
    assert outb.shape == (1024, output_size)
    assert jnp.allclose(outb, refb, atol=5e-4, rtol=5e-4)

    print("KERNEL_OK")
</pallas_src>

<mosaic_0001>
module attributes {stable_mosaic.version = 11 : i64} {
  func.func @kernel(%arg0: i32, %arg1: memref<8x8xf32, #tpu.memory_space<vmem>>, %arg2: memref<160x128xf32, #tpu.memory_space<vmem>>, %arg3: memref<8x4xf32, #tpu.memory_space<vmem>>) attributes {dimension_semantics = [#tpu.dimension_semantics<parallel>], iteration_bounds = array<i64: 1>, scalar_prefetch = 0 : i64, scratch_operands = 0 : i64, tpu.core_type = #tpu.core_type<tc>, window_params = [{transform_indices = @transform_0, window_bounds = array<i64: 8, 8>}, {pipeline_mode = #tpu.pipeline_mode<synchronous>, transform_indices = @transform_1, window_bounds = array<i64: 160, 128>}, {transform_indices = @transform_2, window_bounds = array<i64: 8, 4>}]} {
    %c0 = arith.constant 0 : index
    %c0_0 = arith.constant 0 : index
    %0 = vector.load %arg1[%c0, %c0_0] : memref<8x8xf32, #tpu.memory_space<vmem>>, vector<8x8xf32>
    %c0_1 = arith.constant 0 : index
    %c0_2 = arith.constant 0 : index
    %1 = vector.load %arg2[%c0_1, %c0_2] : memref<160x128xf32, #tpu.memory_space<vmem>>, vector<8x64xf32>
    %c8 = arith.constant 8 : index
    %c0_3 = arith.constant 0 : index
    %2 = vector.load %arg2[%c8, %c0_3] : memref<160x128xf32, #tpu.memory_space<vmem>>, vector<1x64xf32>
    %c16 = arith.constant 16 : index
    %c0_4 = arith.constant 0 : index
    %3 = vector.load %arg2[%c16, %c0_4] : memref<160x128xf32, #tpu.memory_space<vmem>>, vector<64x64xf32>
    %c80 = arith.constant 80 : index
    %c0_5 = arith.constant 0 : index
    %4 = vector.load %arg2[%c80, %c0_5] : memref<160x128xf32, #tpu.memory_space<vmem>>, vector<1x64xf32>
    %c88 = arith.constant 88 : index
    %c0_6 = arith.constant 0 : index
    %5 = vector.load %arg2[%c88, %c0_6] : memref<160x128xf32, #tpu.memory_space<vmem>>, vector<64x4xf32>
    %c152 = arith.constant 152 : index
    %c0_7 = arith.constant 0 : index
    %6 = vector.load %arg2[%c152, %c0_7] : memref<160x128xf32, #tpu.memory_space<vmem>>, vector<1x4xf32>
    %cst = arith.constant dense<0.000000e+00> : vector<8x64xf32>
    %7 = tpu.matmul %0, %1, %cst {dimension_numbers = #tpu.dot_dimension_numbers<[1], [0], [0], [1], [0, 0, 1, 1], [], []>} : vector<8x8xf32>, vector<8x64xf32>, vector<8x64xf32> -> vector<8x64xf32>
    %8 = vector.broadcast %2 : vector<1x64xf32> to vector<8x64xf32>
    %9 = arith.addf %7, %8 : vector<8x64xf32>
    %cst_8 = arith.constant 0.000000e+00 : f32
    %10 = vector.broadcast %cst_8 : f32 to vector<8x64xf32>
    %11 = arith.maximumf %9, %10 : vector<8x64xf32>
    %cst_9 = arith.constant dense<0.000000e+00> : vector<8x64xf32>
    %12 = tpu.matmul %11, %3, %cst_9 {dimension_numbers = #tpu.dot_dimension_numbers<[1], [0], [0], [1], [0, 0, 1, 1], [], []>} : vector<8x64xf32>, vector<64x64xf32>, vector<8x64xf32> -> vector<8x64xf32>
    %13 = vector.broadcast %4 : vector<1x64xf32> to vector<8x64xf32>
    %14 = arith.addf %12, %13 : vector<8x64xf32>
    %cst_10 = arith.constant 0.000000e+00 : f32
    %15 = vector.broadcast %cst_10 : f32 to vector<8x64xf32>
    %16 = arith.maximumf %14, %15 : vector<8x64xf32>
    %cst_11 = arith.constant dense<0.000000e+00> : vector<8x4xf32>
    %17 = tpu.matmul %16, %5, %cst_11 {dimension_numbers = #tpu.dot_dimension_numbers<[1], [0], [0], [1], [0, 0, 1, 1], [], []>} : vector<8x64xf32>, vector<64x4xf32>, vector<8x4xf32> -> vector<8x4xf32>
    %18 = vector.broadcast %6 : vector<1x4xf32> to vector<8x4xf32>
    %19 = arith.addf %17, %18 : vector<8x4xf32>
    %cst_12 = arith.constant dense<0xFF800000> : vector<8xf32>
    %20 = vector.multi_reduction <maximumf>, %19, %cst_12 [1] : vector<8x4xf32> to vector<8xf32>
    %21 = vector.shape_cast %20 : vector<8xf32> to vector<8x1xf32>
    %22 = vector.broadcast %21 : vector<8x1xf32> to vector<8x4xf32>
    %23 = arith.subf %19, %22 : vector<8x4xf32>
    %24 = math.exp %23 : vector<8x4xf32>
    %cst_13 = arith.constant dense<0.000000e+00> : vector<8xf32>
    %25 = vector.multi_reduction <add>, %24, %cst_13 [1] : vector<8x4xf32> to vector<8xf32>
    %26 = vector.shape_cast %25 : vector<8xf32> to vector<8x1xf32>
    %27 = tpu.reciprocal %26 {approx = true} : vector<8x1xf32> -> vector<8x1xf32>
    %28 = arith.mulf %26, %27 : vector<8x1xf32>
    %cst_14 = arith.constant 2.000000e+00 : f32
    %29 = vector.broadcast %cst_14 : f32 to vector<8x1xf32>
    %30 = arith.subf %29, %28 : vector<8x1xf32>
    %31 = arith.mulf %27, %30 : vector<8x1xf32>
    %32 = vector.broadcast %31 : vector<8x1xf32> to vector<8x4xf32>
    %33 = arith.mulf %24, %32 : vector<8x4xf32>
    %c0_15 = arith.constant 0 : index
    %c0_16 = arith.constant 0 : index
    %34 = vector.load %arg3[%c0_15, %c0_16] : memref<8x4xf32, #tpu.memory_space<vmem>>, vector<8x4xf32>
    tpu.vector_store %arg3[%c0_15, %c0_16], %33 {strides = array<i32>} : memref<8x4xf32, #tpu.memory_space<vmem>>, vector<8x4xf32>,
    return
  }
  func.func @transform_0(%arg0: i32) -> (i32, i32) {
    %c0_i32 = arith.constant 0 : i32
    %c0_i32_0 = arith.constant 0 : i32
    return %arg0, %c0_i32 : i32, i32
  }
  func.func @transform_1(%arg0: i32) -> (i32, i32) {
    %c0_i32 = arith.constant 0 : i32
    %c0_i32_0 = arith.constant 0 : i32
    %c0_i32_1 = arith.constant 0 : i32
    return %c0_i32, %c0_i32_0 : i32, i32
  }
  func.func @transform_2(%arg0: i32) -> (i32, i32) {
    %c0_i32 = arith.constant 0 : i32
    %c0_i32_0 = arith.constant 0 : i32
    return %arg0, %c0_i32 : i32, i32
  }
}

</mosaic_0001>

<llo_original>
// kernel: tpu_custom_call.1
$region0: #{tpu_custom_call.1}
  #allocation0 [shape = 'u32[]', space=smem, size = 0x4, offset = 0x4, fixed_abs, tag = 'smem constant byte address 0x4 - core index']
  #allocation1 [shape = 'u32[72,128]{1,0:T(1,128)}', space=vmem, size = 0x9000, scoped, tag = 'internal scratch']
  %s0 = inlined_call_operand.hbm [shape: f32[8,8], index: 0, kind: input, shape index: {}]
  %s1 = inlined_call_operand.hbm [shape: f32[160,128], index: 1, kind: input, shape index: {}]
  %s2 = inlined_call_operand.vmem [shape: f32[8,4], index: 2, kind: output, shape index: {}]
  %s3 = sld [smem:[#allocation0]]
  $region26: #{tpu_custom_call.1} parent=0
    _
  %s5 = ssub.s32 1, %s3
  %s6 = scalar_select 0, %s5, %s3
  $region1: #{tpu_custom_call.1} parent=0
    #allocation2 [shape = 'u8[4096]{0}', space=vmem, size = 0x1000, scoped, tag = 'input window, operand 0, single buffered']
    #allocation3 [shape = 's32[1]{0}', space=sflag, size = 0x4, scoped, tag = 'scoped memory for tpu_custom_call.1']
    #allocation4 [shape = 'u8[81920]{0}', space=vmem, size = 0x14000, scoped, tag = 'input window, operand 1, single buffered']
    #allocation5 [shape = 's32[1]{0}', space=sflag, size = 0x4, scoped, tag = 'scoped memory for tpu_custom_call.1']
    %7 = vsyncpa [#allocation3], 0
    %8 = vsyncpa [#allocation5], 0
    // Predicated region
    $region2: #{tpu_custom_call.1} parent=1 // pred_check
      _
    $region3: #{tpu_custom_call.1} parent=1 // pred_check_branch
      %10 = sbr.rel (0) target = $region5
    $region4: #{tpu_custom_call.1} parent=1 // pred_region
      %12 = vsyncadd [#allocation3], 0
      %s14 = sshll.u32 %s0, 4
      %s15 = int_to_ptr.hbm [resolvable:$true] %s14
      %s16 = sshll.u32 [#allocation2], 4
      %s17 = int_to_ptr.vmem [resolvable:$true] %s16
      %19 = dma.hbm_to_vmem [thread:$0]  %s15, 128, %s17, [#allocation3]
    $region5: #{tpu_custom_call.1} parent=1 // pred_fallthru
      _
    // Predicated region
    $region6: #{tpu_custom_call.1} parent=1 // pred_check
      _
    $region7: #{tpu_custom_call.1} parent=1 // pred_check_branch
      %21 = sbr.rel (0) target = $region9
    $region8: #{tpu_custom_call.1} parent=1 // pred_region
      %23 = vsyncadd [#allocation5], 0
      %s24 = sshll.u32 %s1, 4
      %s25 = int_to_ptr.hbm [resolvable:$true] %s24
      %s26 = sshll.u32 [#allocation4], 4
      %s27 = int_to_ptr.vmem [resolvable:$true] %s26
      %32 = dma.hbm_to_vmem [thread:$0]  %s25, 2560, %s27, [#allocation5], 128, 128, 8
    $region9: #{tpu_custom_call.1} parent=1 // pred_fallthru
      _
    // Predicated region
    $region10: #{tpu_custom_call.1} parent=1 // pred_check
      _
    $region11: #{tpu_custom_call.1} parent=1 // pred_check_branch
      %34 = sbr.rel (0) target = $region13
    $region12: #{tpu_custom_call.1} parent=1 // pred_region
      %36 = dma.done [#allocation3], 128
    $region13: #{tpu_custom_call.1} parent=1 // pred_fallthru
      _
    // Predicated region
    $region14: #{tpu_custom_call.1} parent=1 // pred_check
      _
    $region15: #{tpu_custom_call.1} parent=1 // pred_check_branch
      %38 = sbr.rel (0) target = $region17
    $region16: #{tpu_custom_call.1} parent=1 // pred_region
      %40 = dma.done [#allocation5], 2560
    $region17: #{tpu_custom_call.1} parent=1 // pred_fallthru
      _
    %v41 = vld [vmem:[#allocation2] sm:$0xff]
    %v42 = vld [vmem:[#allocation4] sm:$0xff]
    %v43 = vld [vmem:[#allocation4 + $0x8] sm:$0x1]
    %v44 = vld [vmem:[#allocation4 + $0x10] sm:$0xff]
    %v45 = vld [vmem:[#allocation4 + $0x18] sm:$0xff]
    %v46 = vld [vmem:[#allocation4 + $0x20] sm:$0xff]
    %v47 = vld [vmem:[#allocation4 + $0x28] sm:$0xff]
    %v48 = vld [vmem:[#allocation4 + $0x30] sm:$0xff]
    %v49 = vld [vmem:[#allocation4 + $0x38] sm:$0xff]
    %v50 = vld [vmem:[#allocation4 + $0x40] sm:$0xff]
    %v51 = vld [vmem:[#allocation4 + $0x48] sm:$0xff]
    %v52 = vld [vmem:[#allocation4 + $0x50] sm:$0x1]
    %v53 = vld [vmem:[#allocation4 + $0x58] sm:$0xff]
    %v54 = vld [vmem:[#allocation4 + $0x60] sm:$0xff]
    %v55 = vld [vmem:[#allocation4 + $0x68] sm:$0xff]
    %v56 = vld [vmem:[#allocation4 + $0x70] sm:$0xff]
    %v57 = vld [vmem:[#allocation4 + $0x78] sm:$0xff]
    %v58 = vld [vmem:[#allocation4 + $0x80] sm:$0xff]
    %v59 = vld [vmem:[#allocation4 + $0x88] sm:$0xff]
    %v60 = vld [vmem:[#allocation4 + $0x90] sm:$0xff]
    %v61 = vld [vmem:[#allocation4 + $0x98] sm:$0x1]
    %v62 = vperm.slane %v43, 0
    %vm63 = vcmask 64512
    %v65 = vsel %vm63, %v41, 0
    %67 = vmatpush.msra.mxu0 0.0
    %68 = vmatpush.msra.mxu0 0.0
    %69 = vmatpush.msra.mxu0 0.0
    %70 = vmatpush.msra.mxu0 0.0
    %71 = vmatpush.msra.mxu0 0.0
    %72 = vmatpush.msra.mxu0 0.0
    %73 = vmatpush.msra.mxu0 0.0
    %74 = vmatpush.msra.mxu0 0.0
    %75 = vmatpush.msra.mxu0 0.0
    %76 = vmatpush.msra.mxu0 0.0
    %77 = vmatpush.msra.mxu0 0.0
    %78 = vmatpush.msra.mxu0 0.0
    %79 = vmatpush.msra.mxu0 0.0
    %80 = vmatpush.msra.mxu0 0.0
    %81 = vmatpush.msra.mxu0 0.0
    %82 = vmatpush.msra.mxu0 %v42
    %83 = vmatmul.f32.gmra.mxu0 %v65
    %v84 = vpop.f32.mrf.mxu0
    %v85 = vadd.f32 %v62, %v84
    %86 = vdwg.mxu0
    %v87 = vmax.f32 %v85, 0.0
    %v88 = vperm.slane %v52, 0
    %vm89 = vcmask 523264
    %v91 = vsel %vm89, %v87, 0
    %93 = vmatpush.msra.mxu0 0.0
    %94 = vmatpush.msra.mxu0 0.0
    %95 = vmatpush.msra.mxu0 0.0
    %96 = vmatpush.msra.mxu0 0.0
    %97 = vmatpush.msra.mxu0 0.0
    %98 = vmatpush.msra.mxu0 0.0
    %99 = vmatpush.msra.mxu0 0.0
    %100 = vmatpush.msra.mxu0 0.0
    %101 = vmatpush.msra.mxu0 %v51
    %102 = vmatpush.msra.mxu0 %v50
    %103 = vmatpush.msra.mxu0 %v49
    %104 = vmatpush.msra.mxu0 %v48
    %105 = vmatpush.msra.mxu0 %v47
    %106 = vmatpush.msra.mxu0 %v46
    %107 = vmatpush.msra.mxu0 %v45
    %108 = vmatpush.msra.mxu0 %v44
    %109 = vmatmul.f32.gmra.mxu0 %v91
    %v110 = vpop.f32.mrf.mxu0
    %v111 = vadd.f32 %v88, %v110
    %112 = vdwg.mxu0
    %v113 = vmax.f32 %v111, 0.0
    %v114 = vperm.slane %v61, 0
    %v116 = vsel %vm89, %v113, 0
    %118 = vmatpush.msra.mxu0 0.0
    %119 = vmatpush.msra.mxu0 0.0
    %120 = vmatpush.msra.mxu0 0.0
    %121 = vmatpush.msra.mxu0 0.0
    %122 = vmatpush.msra.mxu0 0.0
    %123 = vmatpush.msra.mxu0 0.0
    %124 = vmatpush.msra.mxu0 0.0
    %125 = vmatpush.msra.mxu0 0.0
    %126 = vmatpush.msra.mxu0 %v60
    %127 = vmatpush.msra.mxu0 %v59
    %128 = vmatpush.msra.mxu0 %v58
    %129 = vmatpush.msra.mxu0 %v57
    %130 = vmatpush.msra.mxu0 %v56
    %131 = vmatpush.msra.mxu0 %v55
    %132 = vmatpush.msra.mxu0 %v54
    %133 = vmatpush.msra.mxu0 %v53
    %134 = vmatmul.f32.gmra.mxu0 %v116
    %v135 = vpop.f32.mrf.mxu0
    %v136 = vadd.f32 %v114, %v135
    %137 = vdwg.mxu0
    %vm138 = vcmask 31744
    %v139 = vsel %vm138, %v136, -inf
    %140 = vmax.xlane.f32.xlu0 %v139
    %v141 = vpop.xlane.xlu0 %140
    %v142 = vsub.f32 %v136, %v141
    %v143 = vmul.f32 %v142, 1.442695
    %v144 = vpow.pop %v143
    %v145 = vsel %vm138, %v144, 0.0
    %146 = vadd.xlane.f32.xlu0 %v145
    %v147 = vpop.xlane.xlu0 %146
    %v148 = vrcp.pop %v147
    %v149 = vmul.f32 %v147, %v148
    %v150 = vsub.f32 2.0, %v149
    %v151 = vmul.f32 %v148, %v150
    %v152 = vmul.f32 %v144, %v151
    %153 = vst.msk [vmem:[%s2] sm:$0xff] %vm138, %v152
    // Predicated region
    $region18: #{tpu_custom_call.1} parent=1 // pred_check
      _
    $region19: #{tpu_custom_call.1} parent=1 // pred_check_branch
      %155 = sbr.rel (0) target = $region21
    $region20: #{tpu_custom_call.1} parent=1 // pred_region
      _
    $region21: #{tpu_custom_call.1} parent=1 // pred_fallthru
      _
    // Predicated region
    $region22: #{tpu_custom_call.1} parent=1 // pred_check
      _
    $region23: #{tpu_custom_call.1} parent=1 // pred_check_branch
      %157 = sbr.rel (0) target = $region25
    $region24: #{tpu_custom_call.1} parent=1 // pred_region
      _
    $region25: #{tpu_custom_call.1} parent=1 // pred_fallthru
      _
    %158 = vsyncpa [#allocation3], 1
    %159 = vsyncpa [#allocation5], 1

</llo_original>
